<compile_context>
chip_gen: v7x
topology: tpu7x:2x2x1
jax: 0.10.0
libtpu: 0.0.40
codegen_flags: <defaults>
</compile_context>

<pallas_src>
import math
import functools

import jax
import jax.numpy as jnp
from jax.experimental import pallas as pl
from jax.experimental.pallas import tpu as pltpu


# ----------------------------- Pallas kernel ------------------------------ #
def _conv_matmul_kernel(w_ref, p_ref, b_ref, o_ref, acc_ref):
    """grid = (M tiles [parallel], K tiles [arbitrary]).

    w_ref:   (O_pad, tk)  weight tile
    p_ref:   (tk, tm)     im2col patch tile (K on sublanes, M on lanes)
    b_ref:   (O_pad, 1)   bias (f32)
    o_ref:   (O_pad, tm)  output tile (lane-dense: tm is a multiple of 128)
    acc_ref: (O_pad, tm)  f32 accumulator scratch
    """
    k = pl.program_id(1)

    @pl.when(k == 0)
    def _init():
        acc_ref[...] = jnp.zeros_like(acc_ref)

    acc_ref[...] += jnp.dot(w_ref[...], p_ref[...],
                            preferred_element_type=jnp.float32)

    @pl.when(k == pl.num_programs(1) - 1)
    def _finalize():
        o_ref[...] = (acc_ref[...] + b_ref[...]).astype(o_ref.dtype)


# --------------------------- pallas_call wrapper --------------------------- #
def _round_up(x, m):
    return (x + m - 1) // m * m


def _matmul_bias_pallas(w2d, patches_t, bias, *, max_tm=512, k_tile=512,
                        k_tile_threshold=2048, vmem_budget=32 << 20):
    """out[O, M] (f32) = w2d[O, K] @ patches_t[K, M] + bias[:, None].

    w2d / patches_t may be bf16 (or f32); bias is f32; output is f32.
    """
    O, K = w2d.shape
    K2, M = patches_t.shape
    assert K == K2

    # --- alignment padding targets ---
    O_pad = _round_up(O, 8)                        # sublane multiple
    if K <= k_tile_threshold:
        K_pad, tk_eff = _round_up(K, 8), None      # single K block (full K resident)
        tk_eff = K_pad
    else:
        K_pad = _round_up(K, k_tile)               # K-tiled with accumulator
        tk_eff = k_tile
    M_pad = _round_up(M, 128)                      # lane multiple

    # Pick the largest M tile <= max_tm that divides M_pad, then shrink until the
    # (double-buffered) tiles fit the VMEM budget (v7x: 64 MiB phys / 32 scoped).
    def vmem_need(tm_):
        isz = patches_t.dtype.itemsize
        return (2 * O_pad * tk_eff * isz          # weight tiles (double-buffered)
                + 2 * tk_eff * tm_ * isz          # patch tiles (double-buffered)
                + 2 * O_pad * 4                   # bias
                + 2 * O_pad * tm_ * 4             # output tiles
                + O_pad * tm_ * 4)                # accumulator scratch

    tm = min(max_tm, M_pad)
    while M_pad % tm != 0:
        tm -= 128
    while tm > 128 and vmem_need(tm) > vmem_budget:
        tm -= 128
        while M_pad % tm != 0:
            tm -= 128

    # --- zero padding (fused by XLA into the im2col materialization) ---
    if (O_pad, K_pad) != (O, K):
        w2d = jnp.pad(w2d, ((0, O_pad - O), (0, K_pad - K)))
    if (K_pad, M_pad) != (K, M):
        patches_t = jnp.pad(patches_t, ((0, K_pad - K), (0, M_pad - M)))
    b2 = jnp.pad(bias.astype(jnp.float32).reshape(O, 1), ((0, O_pad - O), (0, 0)))

    grid = (M_pad // tm, K_pad // tk_eff)
    isz = patches_t.dtype.itemsize
    cost = pl.CostEstimate(
        flops=2 * M_pad * K_pad * O_pad,
        transcendentals=0,
        bytes_accessed=(O_pad * K_pad * isz * grid[0]   # weight stream (per M tile)
                        + K_pad * M_pad * isz           # patches stream
                        + O_pad * 4                     # bias
                        + O_pad * M_pad * 4))           # output

    out_t = pl.pallas_call(
        _conv_matmul_kernel,
        out_shape=jax.ShapeDtypeStruct((O_pad, M_pad), jnp.float32),
        grid_spec=pltpu.PrefetchScalarGridSpec(
            num_scalar_prefetch=0,
            grid=grid,
            in_specs=[
                pl.BlockSpec((O_pad, tk_eff), lambda m, k: (0, k)),  # weight
                pl.BlockSpec((tk_eff, tm), lambda m, k: (k, m)),     # patches
                pl.BlockSpec((O_pad, 1), lambda m, k: (0, 0)),       # bias
            ],
            out_specs=pl.BlockSpec((O_pad, tm), lambda m, k: (0, m)),
            scratch_shapes=[pltpu.VMEM((O_pad, tm), jnp.float32)],
        ),
        compiler_params=pltpu.CompilerParams(
            dimension_semantics=("parallel", "arbitrary"),
            vmem_limit_bytes=int(min(max(2 * vmem_need(tm), 4 << 20), vmem_budget)),
        ),
        cost_estimate=cost,
    )(w2d, patches_t, b2)

    return out_t[:O, :M]


# ----------------------------- Conv2D wrapper ------------------------------ #
def conv2d_svd_forward(x, weight, bias, *, stride=1, padding=0,
                       compute_dtype=jnp.bfloat16):
    """Equivalent of Conv2D_SVD.forward(x, task_id=-1).

    x:      (N, C, H, W)   float32 (NCHW, PyTorch convention)
    weight: (O, C, KH, KW) float32 (PyTorch OIHW conv weight layout)
    bias:   (O,) float32 or None
    returns (N, O, OH, OW) float32
    """
    N, C, H, W = x.shape
    Oc, _, KH, KW = weight.shape
    s, p = stride, padding
    OH = (H + 2 * p - KH) // s + 1
    OW = (W + 2 * p - KW) // s + 1

    # --- im2col, built directly in the transposed (K, M) layout so the big
    #     M = N*OH*OW dimension lands on lanes (glue; fused by XLA) ---
    # TODO(synk): fuse im2col into the kernel (DMA contiguous input rows and
    # accumulate the KH*KW shifted matmuls in VMEM) to cut the 9x patch traffic.
    x_pad = jnp.pad(x, ((0, 0), (0, 0), (p, p), (p, p)))
    cols = []
    for kh in range(KH):
        for kw in range(KW):
            cols.append(x_pad[:, :, kh:kh + s * OH:s, kw:kw + s * OW:s])  # (N,C,OH,OW)
    # (KH*KW, N, C, OH, OW) -> (C, KH*KW, N, OH, OW) -> (K, M)
    patches_t = jnp.stack(cols, axis=0).transpose(2, 0, 1, 3, 4)
    patches_t = patches_t.reshape(C * KH * KW, N * OH * OW).astype(compute_dtype)

    # Weight (O, C, KH, KW) -> (O, K) with K ordered (C, KH, KW) to match patches.
    w2d = weight.reshape(Oc, C * KH * KW).astype(compute_dtype)

    if bias is None:
        bias = jnp.zeros((Oc,), jnp.float32)

    # --- hot path: Pallas matmul + bias, transposed output (O, M) ---
    out_t = _matmul_bias_pallas(w2d, patches_t, bias)          # (O, M) f32

    # (O, N*OH*OW) -> NCHW
    return out_t.reshape(Oc, N, OH, OW).transpose(1, 0, 2, 3)


# ----------------------- deterministic parameter init ---------------------- #
def init_conv_params(key, in_channels, out_channels, kernel_size):
    """Mimics nn.Conv2d.reset_parameters(): kaiming_uniform(a=sqrt(5)) for weight,
    uniform(-1/sqrt(fan_in), 1/sqrt(fan_in)) for bias."""
    kw_, kb_ = jax.random.split(key)
    fan_in = in_channels * kernel_size * kernel_size
    bound = 1.0 / math.sqrt(fan_in)
    weight = jax.random.uniform(
        kw_, (out_channels, in_channels, kernel_size, kernel_size),
        minval=-bound, maxval=bound, dtype=jnp.float32)
    bias = jax.random.uniform(
        kb_, (out_channels,), minval=-bound, maxval=bound, dtype=jnp.float32)
    return weight, bias


if __name__ == "__main__":
    key = jax.random.PRNGKey(0)
    k_x, k_p = jax.random.split(key)

    # Small shapes consistent with the module: batch=2, in=4, out=8, 16x16, k=3, pad=1.
    N, C, H, W = 2, 4, 16, 16
    OUT, KS, STRIDE, PAD = 8, 3, 1, 1

    x = jax.random.normal(k_x, (N, C, H, W), dtype=jnp.float32)
    weight, bias = init_conv_params(k_p, C, OUT, KS)

    # Reference: XLA conv (NCHW / OIHW) + bias.
    ref = jax.lax.conv_general_dilated(
        x, weight, window_strides=(STRIDE, STRIDE),
        padding=[(PAD, PAD), (PAD, PAD)],
        dimension_numbers=("NCHW", "OIHW", "NCHW"),
    ) + bias.reshape(1, OUT, 1, 1)

    # f32 compute path (exact check).
    fwd_f32 = jax.jit(functools.partial(conv2d_svd_forward, stride=STRIDE,
                                        padding=PAD, compute_dtype=jnp.float32))
    out_f32 = fwd_f32(x, weight, bias)
    jax.block_until_ready(out_f32)
    assert out_f32.shape == (N, OUT, H, W), out_f32.shape
    assert jnp.allclose(out_f32, ref, atol=1e-4, rtol=1e-4), \
        float(jnp.max(jnp.abs(out_f32 - ref)))

    # bf16 compute path (default; MXU-native on v6e/v7x) -- loosened tolerance.
    fwd_bf16 = jax.jit(functools.partial(conv2d_svd_forward, stride=STRIDE,
                                         padding=PAD, compute_dtype=jnp.bfloat16))
    out_bf16 = fwd_bf16(x, weight, bias)
    jax.block_until_ready(out_bf16)
    assert out_bf16.shape == (N, OUT, H, W), out_bf16.shape
    assert jnp.allclose(out_bf16, ref, atol=5e-2, rtol=5e-2), \
        float(jnp.max(jnp.abs(out_bf16 - ref)))

    print("KERNEL_OK")
</pallas_src>

<mosaic_0001>
module attributes {stable_mosaic.version = 11 : i64} {
  func.func @_conv_matmul_kernel(%arg0: i32, %arg1: i32, %arg2: memref<8x40xf32, #tpu.memory_space<vmem>>, %arg3: memref<40x512xf32, #tpu.memory_space<vmem>>, %arg4: memref<8x1xf32, #tpu.memory_space<vmem>>, %arg5: memref<8x512xf32, #tpu.memory_space<vmem>>, %arg6: memref<8x512xf32, #tpu.memory_space<vmem>>) attributes {dimension_semantics = [#tpu.dimension_semantics<parallel>, #tpu.dimension_semantics<arbitrary>], iteration_bounds = array<i64: 1, 1>, scalar_prefetch = 0 : i64, scratch_operands = 1 : i64, tpu.core_type = #tpu.core_type<tc>, window_params = [{transform_indices = @transform_0, window_bounds = array<i64: 8, 40>}, {transform_indices = @transform_1, window_bounds = array<i64: 40, 512>}, {pipeline_mode = #tpu.pipeline_mode<synchronous>, transform_indices = @transform_2, window_bounds = array<i64: 8, 1>}, {transform_indices = @transform_3, window_bounds = array<i64: 8, 512>}]} {
    %c0_i32 = arith.constant 0 : i32
    %0 = arith.cmpi eq, %arg1, %c0_i32 : i32
    %1 = arith.extui %0 : i1 to i32
    %c0_i32_0 = arith.constant 0 : i32
    %2 = arith.cmpi ne, %1, %c0_i32_0 : i32
    scf.if %2 {
      %cst_10 = arith.constant 0.000000e+00 : f32
      %12 = vector.broadcast %cst_10 : f32 to vector<8x512xf32>
      %c0_11 = arith.constant 0 : index
      %c0_12 = arith.constant 0 : index
      %13 = vector.load %arg6[%c0_11, %c0_12] : memref<8x512xf32, #tpu.memory_space<vmem>>, vector<8x512xf32>
      tpu.vector_store %arg6[%c0_11, %c0_12], %12 {strides = array<i32>} : memref<8x512xf32, #tpu.memory_space<vmem>>, vector<8x512xf32>,
    } else {
    }
    %c0 = arith.constant 0 : index
    %c0_1 = arith.constant 0 : index
    %3 = vector.load %arg6[%c0, %c0_1] : memref<8x512xf32, #tpu.memory_space<vmem>>, vector<8x512xf32>
    %c0_2 = arith.constant 0 : index
    %c0_3 = arith.constant 0 : index
    %4 = vector.load %arg2[%c0_2, %c0_3] : memref<8x40xf32, #tpu.memory_space<vmem>>, vector<8x40xf32>
    %c0_4 = arith.constant 0 : index
    %c0_5 = arith.constant 0 : index
    %5 = vector.load %arg3[%c0_4, %c0_5] : memref<40x512xf32, #tpu.memory_space<vmem>>, vector<40x512xf32>
    %cst = arith.constant dense<0.000000e+00> : vector<8x512xf32>
    %6 = tpu.matmul %4, %5, %cst {dimension_numbers = #tpu.dot_dimension_numbers<[1], [0], [0], [1], [0, 0, 1, 1], [], []>} : vector<8x40xf32>, vector<40x512xf32>, vector<8x512xf32> -> vector<8x512xf32>
    %7 = arith.addf %3, %6 : vector<8x512xf32>
    %c0_6 = arith.constant 0 : index
    %c0_7 = arith.constant 0 : index
    %8 = vector.load %arg6[%c0_6, %c0_7] : memref<8x512xf32, #tpu.memory_space<vmem>>, vector<8x512xf32>
    tpu.vector_store %arg6[%c0_6, %c0_7], %7 {strides = array<i32>} : memref<8x512xf32, #tpu.memory_space<vmem>>, vector<8x512xf32>,
    %c0_i32_8 = arith.constant 0 : i32
    %9 = arith.cmpi eq, %arg1, %c0_i32_8 : i32
    %10 = arith.extui %9 : i1 to i32
    %c0_i32_9 = arith.constant 0 : i32
    %11 = arith.cmpi ne, %10, %c0_i32_9 : i32
    scf.if %11 {
      %c0_10 = arith.constant 0 : index
      %c0_11 = arith.constant 0 : index
      %12 = vector.load %arg6[%c0_10, %c0_11] : memref<8x512xf32, #tpu.memory_space<vmem>>, vector<8x512xf32>
      %c0_12 = arith.constant 0 : index
      %c0_13 = arith.constant 0 : index
      %13 = vector.load %arg4[%c0_12, %c0_13] : memref<8x1xf32, #tpu.memory_space<vmem>>, vector<8x1xf32>
      %14 = vector.broadcast %13 : vector<8x1xf32> to vector<8x512xf32>
      %15 = arith.addf %12, %14 : vector<8x512xf32>
      %c0_14 = arith.constant 0 : index
      %c0_15 = arith.constant 0 : index
      %16 = vector.load %arg5[%c0_14, %c0_15] : memref<8x512xf32, #tpu.memory_space<vmem>>, vector<8x512xf32>
      tpu.vector_store %arg5[%c0_14, %c0_15], %15 {strides = array<i32>} : memref<8x512xf32, #tpu.memory_space<vmem>>, vector<8x512xf32>,
    } else {
    }
    return
  }
  func.func @transform_0(%arg0: i32, %arg1: i32) -> (i32, i32) {
    %c0_i32 = arith.constant 0 : i32
    %c0_i32_0 = arith.constant 0 : i32
    return %c0_i32, %arg1 : i32, i32
  }
  func.func @transform_1(%arg0: i32, %arg1: i32) -> (i32, i32) {
    %c0_i32 = arith.constant 0 : i32
    return %arg1, %arg0 : i32, i32
  }
  func.func @transform_2(%arg0: i32, %arg1: i32) -> (i32, i32) {
    %c0_i32 = arith.constant 0 : i32
    %c0_i32_0 = arith.constant 0 : i32
    %c0_i32_1 = arith.constant 0 : i32
    return %c0_i32, %c0_i32_0 : i32, i32
  }
  func.func @transform_3(%arg0: i32, %arg1: i32) -> (i32, i32) {
    %c0_i32 = arith.constant 0 : i32
    %c0_i32_0 = arith.constant 0 : i32
    return %c0_i32, %arg0 : i32, i32
  }
}

</mosaic_0001>

<llo_original>
// kernel: conv2d_svd_forward.1
$region0: #{conv2d_svd_forward.1}
  #allocation0 [shape = 'u32[]', space=smem, size = 0x4, offset = 0x4, fixed_abs, tag = 'smem constant byte address 0x4 - core index']
  #allocation1 [shape = 'u32[144,128]{1,0:T(1,128)}', space=vmem, size = 0x12000, scoped, tag = 'internal scratch']
  #allocation2 [shape = 'f32[8,512]{1,0:T(8,128)}', space=vmem, size = 0x4000, scoped, tag = 'scratch operand']
  %s0 = inlined_call_operand.vmem [shape: f32[8,40], index: 0, kind: input, shape index: {}]
  %s1 = inlined_call_operand.vmem [shape: f32[40,512], index: 1, kind: input, shape index: {}]
  %s2 = inlined_call_operand.vmem [shape: f32[8,1], index: 2, kind: input, shape index: {}]
  %s3 = inlined_call_operand.vmem [shape: f32[8,512], index: 3, kind: output, shape index: {}]
  %s4 = sld [smem:[#allocation0]]
  $region30: #{conv2d_svd_forward.1} parent=0
    _
  %s6 = ssub.s32 1, %s4
  %s7 = scalar_select 0, %s6, %s4
  // Predicated region
  $region2: #{conv2d_svd_forward.1} parent=0 // pred_check
    _
  $region3: #{conv2d_svd_forward.1} parent=0 // pred_check_branch
    %9 = sbr.rel (0) target = $region5
  $region4: #{conv2d_svd_forward.1} parent=0 // pred_region
    _
  $region5: #{conv2d_svd_forward.1} parent=0 // pred_fallthru
    _
  // Predicated region
  $region6: #{conv2d_svd_forward.1} parent=0 // pred_check
    _
  $region7: #{conv2d_svd_forward.1} parent=0 // pred_check_branch
    %11 = sbr.rel (0) target = $region9
  $region8: #{conv2d_svd_forward.1} parent=0 // pred_region
    _
  $region9: #{conv2d_svd_forward.1} parent=0 // pred_fallthru
    _
  // Predicated region
  $region10: #{conv2d_svd_forward.1} parent=0 // pred_check
    _
  $region11: #{conv2d_svd_forward.1} parent=0 // pred_check_branch
    %13 = sbr.rel (0) target = $region13
  $region12: #{conv2d_svd_forward.1} parent=0 // pred_region
    _
  $region13: #{conv2d_svd_forward.1} parent=0 // pred_fallthru
    _
  %p14 = scmp.eq.s32.totalorder 0, 0
  // Predicated region
  $region14: #{conv2d_svd_forward.1} parent=0 // pred_check
    %p15 = pneg %p14
  $region15: #{conv2d_svd_forward.1} parent=0 // pred_check_branch
    %17 = sbr.rel (%p15) target = $region17
  $region16: #{conv2d_svd_forward.1} parent=0 // pred_region
    %18 = vst [vmem:[#allocation2] sm:$0xff] 0.0
    %19 = vst [vmem:[#allocation2 + $0x8] sm:$0xff] 0.0
    %20 = vst [vmem:[#allocation2 + $0x10] sm:$0xff] 0.0
    %21 = vst [vmem:[#allocation2 + $0x18] sm:$0xff] 0.0
  $region17: #{conv2d_svd_forward.1} parent=0 // pred_fallthru
    _
  %v22 = vld [vmem:[#allocation2] sm:$0xff]
  %v23 = vld [vmem:[#allocation2 + $0x8] sm:$0xff]
  %v24 = vld [vmem:[#allocation2 + $0x10] sm:$0xff]
  %v25 = vld [vmem:[#allocation2 + $0x18] sm:$0xff]
  %v26 = vld [vmem:[%s0] sm:$0xff]
  %v27 = vld [vmem:[%s1] sm:$0xff]
  %v28 = vld [vmem:[%s1 + $0x8] sm:$0xff]
  %v29 = vld [vmem:[%s1 + $0x10] sm:$0xff]
  %v30 = vld [vmem:[%s1 + $0x18] sm:$0xff]
  %v31 = vld [vmem:[%s1 + $0x20] sm:$0xff]
  %v32 = vld [vmem:[%s1 + $0x28] sm:$0xff]
  %v33 = vld [vmem:[%s1 + $0x30] sm:$0xff]
  %v34 = vld [vmem:[%s1 + $0x38] sm:$0xff]
  %v35 = vld [vmem:[%s1 + $0x40] sm:$0xff]
  %v36 = vld [vmem:[%s1 + $0x48] sm:$0xff]
  %v37 = vld [vmem:[%s1 + $0x50] sm:$0xff]
  %v38 = vld [vmem:[%s1 + $0x58] sm:$0xff]
  %v39 = vld [vmem:[%s1 + $0x60] sm:$0xff]
  %v40 = vld [vmem:[%s1 + $0x68] sm:$0xff]
  %v41 = vld [vmem:[%s1 + $0x70] sm:$0xff]
  %v42 = vld [vmem:[%s1 + $0x78] sm:$0xff]
  %v43 = vld [vmem:[%s1 + $0x80] sm:$0xff]
  %v44 = vld [vmem:[%s1 + $0x88] sm:$0xff]
  %v45 = vld [vmem:[%s1 + $0x90] sm:$0xff]
  %v46 = vld [vmem:[%s1 + $0x98] sm:$0xff]
  %vm47 = vcmask 326656
  %v49 = vsel %vm47, %v26, 0
  %51 = vmatprep.subr.mxu0 %v28
  %52 = vmatpush1.msra.mxu0 %v27
  %53 = vmatprep.subr.mxu0 %v32
  %54 = vmatpush1.msra.mxu0 %v31
  %55 = vmatprep.subr.mxu0 %v36
  %56 = vmatpush1.msra.mxu0 %v35
  %57 = vmatprep.subr.mxu0 %v40
  %58 = vmatpush1.msra.mxu0 %v39
  %59 = vmatprep.subr.mxu0 %v44
  %60 = vmatpush1.msra.mxu0 %v43
  %61 = vmatprep.subr.mxu0 0.0
  %62 = vmatpush1.msra.mxu0 0.0
  %63 = vmatprep.subr.mxu0 0.0
  %64 = vmatpush1.msra.mxu0 0.0
  %65 = vmatprep.subr.mxu0 0.0
  %66 = vmatpush1.msra.mxu0 0.0
  %67 = vmatprep.subr.mxu0 0.0
  %68 = vmatpush1.msra.mxu0 0.0
  %69 = vmatprep.subr.mxu0 0.0
  %70 = vmatpush1.msra.mxu0 0.0
  %71 = vmatprep.subr.mxu0 0.0
  %72 = vmatpush1.msra.mxu0 0.0
  %73 = vmatprep.subr.mxu0 0.0
  %74 = vmatpush1.msra.mxu0 0.0
  %75 = vmatprep.subr.mxu0 0.0
  %76 = vmatpush1.msra.mxu0 0.0
  %77 = vmatprep.subr.mxu0 0.0
  %78 = vmatpush1.msra.mxu0 0.0
  %79 = vmatprep.subr.mxu0 0.0
  %80 = vmatpush1.msra.mxu0 0.0
  %81 = vmatprep.subr.mxu0 0.0
  %82 = vmatpush1.msra.mxu0 0.0
  %83 = vmatprep.subr.mxu0 0.0
  %84 = vmatpush1.msra.mxu0 0.0
  %85 = vmatprep.subr.mxu0 0.0
  %86 = vmatpush1.msra.mxu0 0.0
  %87 = vmatprep.subr.mxu0 0.0
  %88 = vmatpush1.msra.mxu0 0.0
  %89 = vmatprep.subr.mxu0 0.0
  %90 = vmatpush1.msra.mxu0 0.0
  %91 = vmatprep.subr.mxu0 0.0
  %92 = vmatpush1.msra.mxu0 0.0
  %93 = vmatprep.subr.mxu0 0.0
  %94 = vmatpush1.msra.mxu0 0.0
  %95 = vmatprep.subr.mxu0 0.0
  %96 = vmatpush1.msra.mxu0 0.0
  %97 = vmatprep.subr.mxu0 0.0
  %98 = vmatpush1.msra.mxu0 0.0
  %99 = vmatprep.subr.mxu0 0.0
  %100 = vmatpush1.msra.mxu0 0.0
  %101 = vmatprep.subr.mxu0 0.0
  %102 = vmatpush1.msra.mxu0 0.0
  %103 = vmatprep.subr.mxu0 0.0
  %104 = vmatpush1.msra.mxu0 0.0
  %105 = vmatprep.subr.mxu0 0.0
  %106 = vmatpush1.msra.mxu0 0.0
  %107 = vmatprep.subr.mxu0 0.0
  %108 = vmatpush1.msra.mxu0 0.0
  %109 = vmatprep.subr.mxu0 0.0
  %110 = vmatpush1.msra.mxu0 0.0
  %111 = vmatprep.subr.mxu0 0.0
  %112 = vmatpush1.msra.mxu0 0.0
  %113 = vmatprep.subr.mxu0 0.0
  %114 = vmatpush1.msra.mxu0 0.0
  %115 = vmatprep.mubr.f32.mxu0 0.0
  %116 = vmatmul.mubr.f32.gmra.mrb[0].mxu0 %v49
  %v117 = vpop.f32.mrb[0].mxu0
  %v118 = vadd.f32 0.0, %v117
  %v119 = vpop.f32.mrb[0].mxu0
  %v120 = vadd.f32 0.0, %v119
  %121 = vdwg.mxu0
  %122 = vmatprep.subr.mxu0 %v30
  %123 = vmatpush1.msra.mxu0 %v29
  %124 = vmatprep.subr.mxu0 %v34
  %125 = vmatpush1.msra.mxu0 %v33
  %126 = vmatprep.subr.mxu0 %v38
  %127 = vmatpush1.msra.mxu0 %v37
  %128 = vmatprep.subr.mxu0 %v42
  %129 = vmatpush1.msra.mxu0 %v41
  %130 = vmatprep.subr.mxu0 %v46
  %131 = vmatpush1.msra.mxu0 %v45
  %132 = vmatprep.subr.mxu0 0.0
  %133 = vmatpush1.msra.mxu0 0.0
  %134 = vmatprep.subr.mxu0 0.0
  %135 = vmatpush1.msra.mxu0 0.0
  %136 = vmatprep.subr.mxu0 0.0
  %137 = vmatpush1.msra.mxu0 0.0
  %138 = vmatprep.subr.mxu0 0.0
  %139 = vmatpush1.msra.mxu0 0.0
  %140 = vmatprep.subr.mxu0 0.0
  %141 = vmatpush1.msra.mxu0 0.0
  %142 = vmatprep.subr.mxu0 0.0
  %143 = vmatpush1.msra.mxu0 0.0
  %144 = vmatprep.subr.mxu0 0.0
  %145 = vmatpush1.msra.mxu0 0.0
  %146 = vmatprep.subr.mxu0 0.0
  %147 = vmatpush1.msra.mxu0 0.0
  %148 = vmatprep.subr.mxu0 0.0
  %149 = vmatpush1.msra.mxu0 0.0
  %150 = vmatprep.subr.mxu0 0.0
  %151 = vmatpush1.msra.mxu0 0.0
  %152 = vmatprep.subr.mxu0 0.0
  %153 = vmatpush1.msra.mxu0 0.0
  %154 = vmatprep.subr.mxu0 0.0
  %155 = vmatpush1.msra.mxu0 0.0
  %156 = vmatprep.subr.mxu0 0.0
  %157 = vmatpush1.msra.mxu0 0.0
  %158 = vmatprep.subr.mxu0 0.0
  %159 = vmatpush1.msra.mxu0 0.0
  %160 = vmatprep.subr.mxu0 0.0
  %161 = vmatpush1.msra.mxu0 0.0
  %162 = vmatprep.subr.mxu0 0.0
  %163 = vmatpush1.msra.mxu0 0.0
  %164 = vmatprep.subr.mxu0 0.0
  %165 = vmatpush1.msra.mxu0 0.0
  %166 = vmatprep.subr.mxu0 0.0
  %167 = vmatpush1.msra.mxu0 0.0
  %168 = vmatprep.subr.mxu0 0.0
  %169 = vmatpush1.msra.mxu0 0.0
  %170 = vmatprep.subr.mxu0 0.0
  %171 = vmatpush1.msra.mxu0 0.0
  %172 = vmatprep.subr.mxu0 0.0
  %173 = vmatpush1.msra.mxu0 0.0
  %174 = vmatprep.subr.mxu0 0.0
  %175 = vmatpush1.msra.mxu0 0.0
  %176 = vmatprep.subr.mxu0 0.0
  %177 = vmatpush1.msra.mxu0 0.0
  %178 = vmatprep.subr.mxu0 0.0
  %179 = vmatpush1.msra.mxu0 0.0
  %180 = vmatprep.subr.mxu0 0.0
  %181 = vmatpush1.msra.mxu0 0.0
  %182 = vmatprep.subr.mxu0 0.0
  %183 = vmatpush1.msra.mxu0 0.0
  %184 = vmatprep.subr.mxu0 0.0
  %185 = vmatpush1.msra.mxu0 0.0
  %186 = vmatprep.mubr.f32.mxu0 0.0
  %187 = vmatmul.mubr.f32.gmra.mrb[0].mxu0 %v49
  %v188 = vpop.f32.mrb[0].mxu0
  %v189 = vadd.f32 0.0, %v188
  %v190 = vpop.f32.mrb[0].mxu0
  %v191 = vadd.f32 0.0, %v190
  %192 = vdwg.mxu0
  %v193 = vadd.f32 %v22, %v118
  %v194 = vadd.f32 %v23, %v120
  %v195 = vadd.f32 %v24, %v189
  %v196 = vadd.f32 %v25, %v191
  %197 = vst [vmem:[#allocation2] sm:$0xff] %v193
  %198 = vst [vmem:[#allocation2 + $0x8] sm:$0xff] %v194
  %199 = vst [vmem:[#allocation2 + $0x10] sm:$0xff] %v195
  %200 = vst [vmem:[#allocation2 + $0x18] sm:$0xff] %v196
  // Predicated region
  $region18: #{conv2d_svd_forward.1} parent=0 // pred_check
    %p201 = pneg %p14
  $region19: #{conv2d_svd_forward.1} parent=0 // pred_check_branch
    %203 = sbr.rel (%p201) target = $region21
  $region20: #{conv2d_svd_forward.1} parent=0 // pred_region
    %v204 = vld [vmem:[#allocation2] sm:$0xff]
    %v205 = vld [vmem:[#allocation2 + $0x8] sm:$0xff]
    %v206 = vld [vmem:[#allocation2 + $0x10] sm:$0xff]
    %v207 = vld [vmem:[#allocation2 + $0x18] sm:$0xff]
    %v208 = vld [vmem:[%s2] sm:$0xff]
    %210 = vset.pattern.permute.xlu0 0
    %211 = vperm.xlu0 %210, %v208
    %v212 = vpop.permute.xlu0 %211
    %v214 = vadd.f32 %v204, %v212
    %v215 = vadd.f32 %v205, %v212
    %v216 = vadd.f32 %v206, %v212
    %v217 = vadd.f32 %v207, %v212
    %218 = vst [vmem:[%s3] sm:$0xff] %v214
    %219 = vst [vmem:[%s3 + $0x8] sm:$0xff] %v215
    %220 = vst [vmem:[%s3 + $0x10] sm:$0xff] %v216
    %221 = vst [vmem:[%s3 + $0x18] sm:$0xff] %v217
  $region21: #{conv2d_svd_forward.1} parent=0 // pred_fallthru
    _
  // Predicated region
  $region22: #{conv2d_svd_forward.1} parent=0 // pred_check
    _
  $region23: #{conv2d_svd_forward.1} parent=0 // pred_check_branch
    %223 = sbr.rel (0) target = $region25
  $region24: #{conv2d_svd_forward.1} parent=0 // pred_region
    _
  $region25: #{conv2d_svd_forward.1} parent=0 // pred_fallthru
    _
  // Predicated region
  $region26: #{conv2d_svd_forward.1} parent=0 // pred_check
    _
  $region27: #{conv2d_svd_forward.1} parent=0 // pred_check_branch
    %225 = sbr.rel (0) target = $region29
  $region28: #{conv2d_svd_forward.1} parent=0 // pred_region
    _
  $region29: #{conv2d_svd_forward.1} parent=0 // pred_fallthru
    _

</llo_original>
